<compile_context>
chip_gen: v7x
topology: tpu7x:2x2x1
jax: 0.10.0
libtpu: 0.0.40
codegen_flags: <defaults>
</compile_context>

<pallas_src>
import jax
import jax.numpy as jnp
import numpy as np
from jax.experimental import pallas as pl
from jax.experimental.pallas import tpu as pltpu


def _round_up(x: int, m: int) -> int:
    return ((x + m - 1) // m) * m


def _choose_block_rows(B: int, C: int, out_itemsize: int, block_rows: int) -> int:
    """Pick the per-step row tile TB (multiple of 8 sublanes)."""
    tb = _round_up(min(int(block_rows), max(B, 1)), 8)
    if B > 8:
        # Never collapse a big batch into one grid step: >= 2 steps lets the
        # "parallel" grid axis shard across v7x's 2 TensorCores.
        tb = min(tb, _round_up((B + 1) // 2, 8))
    # Keep the double-buffered output tile under ~12 MiB so the kernel fits
    # v5e's 16 MiB default scoped-VMEM limit (v6e/v7x defaults are 32 MiB).
    vmem_cap = (12 * 1024 * 1024) // max(1, 2 * C * out_itemsize)
    vmem_cap = max(8, (vmem_cap // 8) * 8)
    return max(8, min(tb, vmem_cap))


def _timesteps_kernel(table_ref, t_ref, out_ref):
    # table_ref: (2, C) f32 -- row 0: per-channel frequency (scale folded in),
    #                          row 1: per-channel phase (0 for sin, pi/2 for cos).
    # t_ref:     (TB, 1) f32 timestep tile.
    # out_ref:   (TB, C) out_dtype -- single full-tile, lane-dense store.
    t = t_ref[...]                       # (TB, 1)
    freqs = table_ref[0:1, :]            # (1, C)
    phase = table_ref[1:2, :]            # (1, C)
    out_ref[...] = jnp.sin(t * freqs + phase).astype(out_ref.dtype)


def timesteps_embedding(timesteps, num_channels, *, flip_sin_to_cos=False,
                        downscale_freq_shift=1.0, scale=1.0, max_period=10000,
                        out_dtype=jnp.float32, block_rows=512):
    """JAX/Pallas equivalent of diffusers `Timesteps.forward`.

    timesteps: 1-D array of shape (B,), any numeric dtype.
    returns:   (B, num_channels) array of `out_dtype` (float32 by default).
    """
    assert timesteps.ndim == 1, "`timesteps` should be a 1D tensor"
    assert num_channels >= 2, "num_channels must be >= 2"
    half_dim = num_channels // 2
    assert float(half_dim) != float(downscale_freq_shift), (
        "half_dim == downscale_freq_shift divides by zero")
    B = int(timesteps.shape[0])
    C = int(num_channels)

    # ---- trace-time frequency/phase table (numpy, f32) -------------------
    k = np.arange(half_dim, dtype=np.float32)
    coeff = np.float32(-np.log(max_period) / (half_dim - downscale_freq_shift))
    f = (np.exp(k * coeff) * np.float32(scale)).astype(np.float32)
    zeros = np.zeros_like(f)
    halfpi = np.full_like(f, np.float32(np.pi / 2))
    if flip_sin_to_cos:
        phase = np.concatenate([halfpi, zeros])     # [cos | sin]
    else:
        phase = np.concatenate([zeros, halfpi])     # [sin | cos]
    freqs_full = np.concatenate([f, f])
    if C % 2 == 1:
        # Trailing pad column: freq=0, phase=0 -> sin(0)=0 (free zero pad).
        freqs_full = np.concatenate([freqs_full, np.zeros(1, np.float32)])
        phase = np.concatenate([phase, np.zeros(1, np.float32)])
    table = np.stack([freqs_full, phase]).astype(np.float32)   # (2, C)

    # ---- tiling -----------------------------------------------------------
    out_itemsize = int(jnp.dtype(out_dtype).itemsize)
    TB = _choose_block_rows(B, C, out_itemsize, block_rows)
    grid = (pl.cdiv(B, TB),)

    t2d = timesteps.astype(jnp.float32).reshape(B, 1)

    cost = pl.CostEstimate(
        flops=2 * B * C,                 # one mul + one add per element
        transcendentals=B * C,           # one sin per element
        bytes_accessed=B * 4 + 2 * C * 4 + B * C * out_itemsize,
    )

    # TODO(synk): for C < 128 at very large B, fold k=128//C rows into lanes
    # ((B, C) -> (B/k, k*C) view with a tiled table) so output stores are
    # 128-lane dense instead of masked partial stores.
    # TODO(synk): for tiny diffusion batches (B <= 64) the pallas_call launch
    # overhead dominates; in a real model fuse this into the downstream
    # timestep-MLP kernel or let XLA fuse the plain-jnp version.
    out = pl.pallas_call(
        _timesteps_kernel,
        out_shape=jax.ShapeDtypeStruct((B, C), out_dtype),
        grid=grid,
        in_specs=[
            pl.BlockSpec((2, C), lambda i: (0, 0)),     # resident freq/phase
            pl.BlockSpec((TB, 1), lambda i: (i, 0)),    # timestep tile
        ],
        out_specs=pl.BlockSpec((TB, C), lambda i: (i, 0)),
        compiler_params=pltpu.CompilerParams(
            dimension_semantics=("parallel",)),
        cost_estimate=cost,
    )(jnp.asarray(table), t2d)
    return out


def _reference_np(timesteps, num_channels, flip_sin_to_cos,
                  downscale_freq_shift, scale, max_period):
    """Numpy reference matching the PyTorch module (f32 args, f64 sin/cos)."""
    half_dim = num_channels // 2
    k = np.arange(half_dim, dtype=np.float32)
    coeff = np.float32(-np.log(max_period) / (half_dim - downscale_freq_shift))
    freqs = (np.exp(k * coeff) * np.float32(scale)).astype(np.float32)
    t = np.asarray(timesteps, dtype=np.float32)
    emb = (t[:, None] * freqs[None, :]).astype(np.float32).astype(np.float64)
    sin, cos = np.sin(emb), np.cos(emb)
    parts = [cos, sin] if flip_sin_to_cos else [sin, cos]
    out = np.concatenate(parts, axis=-1).astype(np.float32)
    if num_channels % 2 == 1:
        out = np.pad(out, ((0, 0), (0, 1)))
    return out


if __name__ == "__main__":
    key = jax.random.PRNGKey(0)
    B = 8
    timesteps = jax.random.randint(key, (B,), 0, 1000).astype(jnp.float32)

    configs = [
        dict(num_channels=32, flip_sin_to_cos=False),   # narrow channels
        dict(num_channels=32, flip_sin_to_cos=True),    # flip variant
        dict(num_channels=256, flip_sin_to_cos=True),   # typical diffusers size
        dict(num_channels=33, flip_sin_to_cos=False),   # odd channels (zero pad)
    ]
    for cfg in configs:
        out = timesteps_embedding(
            timesteps, cfg["num_channels"],
            flip_sin_to_cos=cfg["flip_sin_to_cos"],
            downscale_freq_shift=1.0, scale=1.0, max_period=10000)
        jax.block_until_ready(out)
        ref = _reference_np(np.asarray(timesteps), cfg["num_channels"],
                            cfg["flip_sin_to_cos"], 1.0, 1.0, 10000)
        assert out.shape == ref.shape, (out.shape, ref.shape)
        assert out.dtype == jnp.float32
        np.testing.assert_allclose(np.asarray(out), ref, rtol=5e-4, atol=5e-4)

    # Multi-tile grid with a partial last block (B=20, TB=8 -> grid=3,
    # last block has 4 valid rows; no wrapper pad/slice involved).
    B2 = 20
    t2 = jax.random.randint(jax.random.PRNGKey(1), (B2,), 0, 1000).astype(
        jnp.float32)
    out2 = timesteps_embedding(t2, 32, block_rows=8)
    jax.block_until_ready(out2)
    ref2 = _reference_np(np.asarray(t2), 32, False, 1.0, 1.0, 10000)
    assert out2.shape == ref2.shape
    np.testing.assert_allclose(np.asarray(out2), ref2, rtol=5e-4, atol=5e-4)

    # v7x-style split: B=40 with default block_rows -> TB=24, grid=2
    # (guaranteed >= 2 grid steps so both TensorCores get work).
    B3 = 40
    t3 = jax.random.randint(jax.random.PRNGKey(2), (B3,), 0, 1000).astype(
        jnp.float32)
    out3 = timesteps_embedding(t3, 256, flip_sin_to_cos=True)
    jax.block_until_ready(out3)
    ref3 = _reference_np(np.asarray(t3), 256, True, 1.0, 1.0, 10000)
    assert out3.shape == ref3.shape
    np.testing.assert_allclose(np.asarray(out3), ref3, rtol=5e-4, atol=5e-4)

    # bf16 output (halves HBM writeback on store-bound v5e/v6e); coarse check.
    out_bf = timesteps_embedding(timesteps, 256, flip_sin_to_cos=True,
                                 out_dtype=jnp.bfloat16)
    jax.block_until_ready(out_bf)
    assert out_bf.dtype == jnp.bfloat16
    ref_bf = _reference_np(np.asarray(timesteps), 256, True, 1.0, 1.0, 10000)
    np.testing.assert_allclose(np.asarray(out_bf).astype(np.float32), ref_bf,
                               rtol=0.0, atol=3e-2)

    print("KERNEL_OK")
</pallas_src>

<mosaic_0001>
module attributes {stable_mosaic.version = 11 : i64} {
  func.func @_timesteps_kernel(%arg0: i32, %arg1: memref<2x32xf32, #tpu.memory_space<vmem>>, %arg2: memref<8x1xf32, #tpu.memory_space<vmem>>, %arg3: memref<8x32xf32, #tpu.memory_space<vmem>>) attributes {dimension_semantics = [#tpu.dimension_semantics<parallel>], iteration_bounds = array<i64: 1>, scalar_prefetch = 0 : i64, scratch_operands = 0 : i64, tpu.core_type = #tpu.core_type<tc>, window_params = [{pipeline_mode = #tpu.pipeline_mode<synchronous>, transform_indices = @transform_0, window_bounds = array<i64: 2, 32>}, {transform_indices = @transform_1, window_bounds = array<i64: 8, 1>}, {transform_indices = @transform_2, window_bounds = array<i64: 8, 32>}]} {
    %c0 = arith.constant 0 : index
    %c0_0 = arith.constant 0 : index
    %0 = vector.load %arg2[%c0, %c0_0] : memref<8x1xf32, #tpu.memory_space<vmem>>, vector<8x1xf32>
    %c0_1 = arith.constant 0 : index
    %c0_2 = arith.constant 0 : index
    %1 = vector.load %arg1[%c0_1, %c0_2] : memref<2x32xf32, #tpu.memory_space<vmem>>, vector<1x32xf32>
    %c1 = arith.constant 1 : index
    %c0_3 = arith.constant 0 : index
    %2 = vector.load %arg1[%c1, %c0_3] : memref<2x32xf32, #tpu.memory_space<vmem>>, vector<1x32xf32>
    %3 = vector.broadcast %0 : vector<8x1xf32> to vector<8x32xf32>
    %4 = vector.broadcast %1 : vector<1x32xf32> to vector<8x32xf32>
    %5 = arith.mulf %3, %4 : vector<8x32xf32>
    %6 = vector.broadcast %2 : vector<1x32xf32> to vector<8x32xf32>
    %7 = arith.addf %5, %6 : vector<8x32xf32>
    %8 = math.sin %7 : vector<8x32xf32>
    %c0_4 = arith.constant 0 : index
    %c0_5 = arith.constant 0 : index
    %9 = vector.load %arg3[%c0_4, %c0_5] : memref<8x32xf32, #tpu.memory_space<vmem>>, vector<8x32xf32>
    tpu.vector_store %arg3[%c0_4, %c0_5], %8 {strides = array<i32>} : memref<8x32xf32, #tpu.memory_space<vmem>>, vector<8x32xf32>,
    return
  }
  func.func @transform_0(%arg0: i32) -> (i32, i32) {
    %c0_i32 = arith.constant 0 : i32
    %c0_i32_0 = arith.constant 0 : i32
    %c0_i32_1 = arith.constant 0 : i32
    return %c0_i32, %c0_i32_0 : i32, i32
  }
  func.func @transform_1(%arg0: i32) -> (i32, i32) {
    %c0_i32 = arith.constant 0 : i32
    %c0_i32_0 = arith.constant 0 : i32
    return %arg0, %c0_i32 : i32, i32
  }
  func.func @transform_2(%arg0: i32) -> (i32, i32) {
    %c0_i32 = arith.constant 0 : i32
    %c0_i32_0 = arith.constant 0 : i32
    return %arg0, %c0_i32 : i32, i32
  }
}

</mosaic_0001>

<llo_original>
// kernel: tpu_custom_call.1
$region0: #{tpu_custom_call.1}
  #allocation0 [shape = 'u32[]', space=smem, size = 0x4, offset = 0x4, fixed_abs, tag = 'smem constant byte address 0x4 - core index']
  #allocation1 [shape = 'u32[144,128]{1,0:T(1,128)}', space=vmem, size = 0x12000, scoped, tag = 'internal scratch']
  %s0 = inlined_call_operand.vmem [shape: f32[2,32], index: 0, kind: input, shape index: {}]
  %s1 = inlined_call_operand.vmem [shape: f32[8,1], index: 1, kind: input, shape index: {}]
  %s2 = inlined_call_operand.hbm [shape: f32[8,32], index: 2, kind: output, shape index: {}]
  %s3 = sld [smem:[#allocation0]]
  $region18: #{tpu_custom_call.1} parent=0
    _
  %s5 = ssub.s32 1, %s3
  %s6 = scalar_select 0, %s5, %s3
  $region1: #{tpu_custom_call.1} parent=0
    #allocation2 [shape = 'u8[4096]{0}', space=vmem, size = 0x1000, scoped, tag = 'output window, operand 0, single buffered']
    #allocation3 [shape = 's32[1]{0}', space=sflag, size = 0x4, scoped, tag = 'scoped memory for tpu_custom_call.1']
    %7 = vsyncpa [#allocation3], 0
    // Predicated region
    $region2: #{tpu_custom_call.1} parent=1 // pred_check
      _
    $region3: #{tpu_custom_call.1} parent=1 // pred_check_branch
      %9 = sbr.rel (0) target = $region5
    $region4: #{tpu_custom_call.1} parent=1 // pred_region
      _
    $region5: #{tpu_custom_call.1} parent=1 // pred_fallthru
      _
    // Predicated region
    $region6: #{tpu_custom_call.1} parent=1 // pred_check
      _
    $region7: #{tpu_custom_call.1} parent=1 // pred_check_branch
      %11 = sbr.rel (0) target = $region9
    $region8: #{tpu_custom_call.1} parent=1 // pred_region
      _
    $region9: #{tpu_custom_call.1} parent=1 // pred_fallthru
      _
    %v12 = vld [vmem:[%s1] sm:$0xff]
    %v13 = vld [vmem:[%s0] sm:$0x1]
    %v14 = vld [vmem:[%s0 + $0x1] sm:$0x1]
    %16 = vset.pattern.permute.xlu0 0
    %17 = vperm.xlu0 %16, %v12
    %v18 = vpop.permute.xlu0 %17
    %v20 = vlaneseq
    %v21 = vshrl.u32 %v20, 7
    %v22 = vsub.s32 0, %v21
    %v23 = vrot.slane %v13, %v22
    %v24 = vmul.f32 %v18, %v23
    %v25 = vlaneseq
    %v26 = vshrl.u32 %v25, 7
    %v27 = vsub.s32 0, %v26
    %v28 = vrot.slane %v14, %v27
    %v29 = vadd.f32 %v24, %v28
    %v30 = vand.u32 2147483647, %v29
    %vm31 = vcmp.le.f32.partialorder %v30, 0.7853982
    %vm32 = vcmp.lt.s32.totalorder %v29, 0
    %v33 = vand.u32 %v29, 2139095040
    %v34 = vshrl.u32 %v33, 23
    %v35 = vsub.s32 %v34, 127
    %v36 = vand.u32 2147483647, %v29
    %v37 = vand.u32 %v36, 8388607
    %v38 = vor.u32 %v37, 8388608
    %v39 = vsub.s32 0, %v38
    %v40 = vadd.s32 %v35, 1
    %vm41 = vcmp.gt.s32.totalorder %v40, 0
    %v42 = vsel %vm41, %v40, 0
    %v43 = vshrl.u32 %v42, 5
    %v44 = vand.u32 %v42, 31
    %v45 = vsub.s32 32, %v44
    %v46 = vshrl.u32 683565275, %v45
    %v47 = vshll.u32 683565275, %v44
    %v48 = vshrl.u32 2475754826, %v45
    %v49 = vor.u32 %v47, %v48
    %v50 = vshll.u32 2475754826, %v44
    %v51 = vshrl.u32 2131351028, %v45
    %v52 = vor.u32 %v50, %v51
    %v53 = vshll.u32 2131351028, %v44
    %v54 = vshrl.u32 2102212464, %v45
    %v55 = vor.u32 %v53, %v54
    %v56 = vshll.u32 2102212464, %v44
    %v57 = vshrl.u32 920167782, %v45
    %v58 = vor.u32 %v56, %v57
    %v59 = vshll.u32 920167782, %v44
    %v60 = vshrl.u32 1326507024, %v45
    %v61 = vor.u32 %v59, %v60
    %vm62 = vcmp.lt.s32.totalorder %v43, 1
    %vm63 = vcmp.lt.s32.totalorder %v43, 2
    %vm64 = vcmp.lt.s32.totalorder %v43, 3
    %vm65 = vcmp.lt.s32.totalorder %v43, 4
    %v66 = vsel %vm62, %v46, %v49
    %v67 = vsel %vm65, %v55, 2102212464
    %v68 = vsel %vm64, %v52, %v67
    %v69 = vsel %vm63, %v66, %v68
    %v70 = vsel %vm62, %v49, %v52
    %v71 = vsel %vm65, %v58, 920167782
    %v72 = vsel %vm64, %v55, %v71
    %v73 = vsel %vm63, %v70, %v72
    %v74 = vsel %vm62, %v52, %v55
    %v75 = vsel %vm65, %v61, 1326507024
    %v76 = vsel %vm64, %v58, %v75
    %v77 = vsel %vm63, %v74, %v76
    %v78 = vshll.u32 %v38, 8
    %v79 = vmul.u32.u64.compose %v78, %v77
    %v80 = vextract.low.u32 %v79
    %v81 = vextract.high.u32 %v79
    %v82 = vmul.u32.u64.compose %v78, %v73
    %v83 = vextract.low.u32 %v82
    %v84 = vextract.high.u32 %v82
    %v85 = vmul.u32 %v78, %v69
    %v86 = vadd.s32 %v81, %v83
    %vm87 = vc.u32 %v81, %v83
    %v88 = vadd.s32 %v84, 1
    %v89 = vsel %vm87, %v88, %v84
    %v90 = vadd.s32 %v85, %v89
    %v91 = vadd.s32 %v90, 536870912
    %v92 = vshrl.u32 %v91, 30
    %v93 = vshll.u32 %v92, 30
    %v94 = vsub.s32 %v90, %v93
    %vm95 = vcmp.lt.s32.totalorder %v94, 0
    %v96 = vsub.s32 0, %v94
    %v97 = vsel %vm95, %v96, %v94
    %v98 = vclz %v97
    %v99 = vsub.s32 %v98, 2
    %vm100 = vcmp.gt.s32.totalorder 0, %v99
    %v101 = vsel %vm100, 0, %v99
    %v102 = vsub.s32 32, %v101
    %v103 = vshll.u32 %v94, %v101
    %v104 = vshrl.u32 %v86, %v102
    %v105 = vor.u32 %v103, %v104
    %v106 = vsub.s32 4294967266, %v101
    %v107 = vadd.s32 %v106, 127
    %v108 = vshll.u32 %v107, 23
    %v109 = vor.u32 4788187, %v108
    %v110 = vand.u32 2147483647, %v109
    %v112 = vcvt.s32.f32 %v105
    %v113 = vmul.f32 %v112, %v110
    %v114 = vxor.u32 %v113, 2147483648
    %v115 = vsel %vm32, %v114, %v113
    %v116 = vsub.s32 4, %v92
    %v117 = vsel %vm32, %v116, %v92
    %v118 = vsel %vm31, %v29, %v115
    %v119 = vsel %vm31, 0, %v117
    %v120 = vcosq.f32.pop %v118
    %v121 = vsinq.f32.pop %v118
    %vm122 = vweird.f32 %v29
    %v123 = vadd.s32 %v119, 3
    %v124 = vand.u32 %v123, 3
    %vm125 = vcmp.lt.s32.totalorder %v124, 2
    %vm126 = vcmp.eq.s32.totalorder %v124, 0
    %v127 = vxor.u32 %v121, 2147483648
    %v128 = vsel %vm126, %v120, %v127
    %vm129 = vcmp.eq.s32.totalorder %v124, 2
    %v130 = vxor.u32 %v120, 2147483648
    %v131 = vsel %vm129, %v130, %v121
    %v132 = vsel %vm125, %v128, %v131
    %v133 = vsel %vm122, nan, %v132
    %vm134 = vcmask 261120
    %135 = vst.msk [vmem:[#allocation2] sm:$0xff] %vm134, %v133
    // Predicated region
    $region10: #{tpu_custom_call.1} parent=1 // pred_check
      _
    $region11: #{tpu_custom_call.1} parent=1 // pred_check_branch
      %137 = sbr.rel (0) target = $region13
    $region12: #{tpu_custom_call.1} parent=1 // pred_region
      %s139 = ssub.s32 128, 128
      %140 = vsyncadd [#allocation3], %s139
      %s142 = sshll.u32 [#allocation2], 4
      %s143 = int_to_ptr.vmem [resolvable:$true] %s142
      %145 = dma.vmem_to_hbm [thread:$0]  %s143, 128, %s2, [#allocation3]
    $region13: #{tpu_custom_call.1} parent=1 // pred_fallthru
      _
    // Predicated region
    $region14: #{tpu_custom_call.1} parent=1 // pred_check
      _
    $region15: #{tpu_custom_call.1} parent=1 // pred_check_branch
      %147 = sbr.rel (0) target = $region17
    $region16: #{tpu_custom_call.1} parent=1 // pred_region
      %148 = dma.done [#allocation3], 128
    $region17: #{tpu_custom_call.1} parent=1 // pred_fallthru
      _
    %149 = vsyncpa [#allocation3], 1

</llo_original>
